<compile_context>
chip_gen: v5e
topology: v5e:2x2
jax: 0.10.0
libtpu: 0.0.40
codegen_flags: <defaults>
</compile_context>

<pallas_src>
import functools

import jax
import jax.numpy as jnp
from jax.experimental import pallas as pl
from jax.experimental.pallas import tpu as pltpu


def _round_up(x, m):
    return ((x + m - 1) // m) * m


# ---------------------------------------------------------------------------
# Fused kernel: encoder matmul -> tanh -> row-pad -> decoder matmul for the
# Nsh images of this grid step, batch folded into the matmul M dimension.
# ---------------------------------------------------------------------------
def _make_fused_kernel(Nsh, H, KH, L, CW, beta):
    H_out = H - KH + 1            # encoder output rows
    Hp = H + KH - 1               # padded hidden rows (= H_out + 2*(KH-1))
    beta = float(beta)
    inv_beta = 1.0 / beta

    def kernel(x_ref, we_ref, wd_ref, be_ref, bd_ref, o_ref):
        # x_ref : (Nsh, H, C_in*W)   NHWC-flat input rows
        # we_ref: (KH*C_in*W, L)     banded encoder weights (lane-padded to L)
        # wd_ref: (KH*L, C_in*W)     banded, spatially-flipped decoder weights
        # be_ref: (1, L)             encoder bias (zero on all pad columns)
        # bd_ref: (1, C_in*W)        decoder bias
        # o_ref : (Nsh*H, C_in*W)    reconstruction rows, lane-dense
        we = we_ref[...]
        wd = wd_ref[...]
        be = be_ref[...]
        bd = bd_ref[...]

        # ---- encoder im2col: KH row-slices (48 lanes each) per image -------
        xl = jnp.concatenate(
            [jnp.concatenate([x_ref[n, dy:dy + H_out, :] for dy in range(KH)],
                             axis=1)
             for n in range(Nsh)], axis=0)              # (Nsh*H_out, KH*CW)
        h = jnp.dot(xl, we, preferred_element_type=jnp.float32) + be
        if beta == 1.0:                                 # trace-time beta
            h = jnp.tanh(h)
        else:
            h = jnp.tanh(beta * h) * inv_beta           # (Nsh*H_out, L)
        # lane padding (columns >= K*Wp and outside the valid hidden window)
        # is structural: zero weights + zero bias -> tanh(0) = 0 there.

        # ---- zero-pad the hidden rows per image -----------------------------
        zrow = jnp.zeros((KH - 1, L), jnp.float32)
        parts = []
        for n in range(Nsh):
            parts += [zrow, h[n * H_out:(n + 1) * H_out, :], zrow]
        hp = jnp.concatenate(parts, axis=0)             # (Nsh*Hp, L)

        # ---- decoder (ConvTranspose2d == full conv with flipped taps) ------
        # each dy-block starts on a 128-lane boundary (L multiple of 128).
        hl = jnp.concatenate(
            [jnp.concatenate([hp[n * Hp + dy:n * Hp + dy + H, :]
                              for dy in range(KH)], axis=1)
             for n in range(Nsh)], axis=0)              # (Nsh*H, KH*L)
        r = jnp.dot(hl, wd, preferred_element_type=jnp.float32) + bd
        o_ref[...] = r.astype(o_ref.dtype)              # one lane-dense store

    return kernel


# ---------------------------------------------------------------------------
# Host-side weight packing into banded matrices (done once per param set).
# ---------------------------------------------------------------------------
def _pack_encoder_weight(w_enc, b_enc, W, W_out, Wp, L):
    # w_enc: (K, C_in, KH, KW) PyTorch Conv2d layout.
    K, C_in, KH, KW = w_enc.shape
    j = jnp.arange(W)
    v = jnp.arange(Wp)
    ow = v - (KW - 1)                                # hidden col of padded col v
    dxm = j[:, None] - ow[None, :]                   # (W, Wp) tap index
    valid = (dxm >= 0) & (dxm < KW) & (ow[None, :] >= 0) & (ow[None, :] < W_out)
    dx_idx = jnp.clip(dxm, 0, KW - 1)
    band = w_enc[:, :, :, dx_idx] * valid.astype(w_enc.dtype)   # (K,C,KH,W,Wp)
    we = band.transpose(2, 1, 3, 0, 4).reshape(KH * C_in * W, K * Wp)
    col_on = ((v >= KW - 1) & (v < KW - 1 + W_out)).astype(b_enc.dtype)
    be = (b_enc[:, None] * col_on[None, :]).reshape(1, K * Wp)
    # lane-pad the hidden width to L with exactly-zero columns / bias.
    we = jnp.pad(we, ((0, 0), (0, L - K * Wp)))
    be = jnp.pad(be, ((0, 0), (0, L - K * Wp)))
    return we, be


def _pack_decoder_weight(w_dec, b_dec, W, Wp, L):
    # w_dec: (K, C_in, KH, KW) PyTorch ConvTranspose2d layout (in, out, kh, kw).
    K, C_in, KH, KW = w_dec.shape
    xx = jnp.arange(W)
    v = jnp.arange(Wp)
    d = v[:, None] - xx[None, :]                     # (Wp, W) tap index
    valid = (d >= 0) & (d < KW)
    dflip = jnp.clip((KW - 1) - d, 0, KW - 1)        # spatial flip along W
    w_fliph = w_dec[:, :, ::-1, :]                   # spatial flip along H
    band = w_fliph[:, :, :, dflip] * valid.astype(w_dec.dtype)  # (K,C,KH,Wp,W)
    wd = band.transpose(2, 0, 3, 1, 4).reshape(KH, K * Wp, C_in * W)
    # zero rows for the lane-padded hidden columns keep the trick exact.
    wd = jnp.pad(wd, ((0, 0), (0, L - K * Wp), (0, 0))).reshape(KH * L, C_in * W)
    bd = jnp.repeat(b_dec, W).reshape(1, C_in * W)
    return wd, bd


def pack_net_params(params, W):
    """Pack once per parameter set (outside the per-call hot path)."""
    K, C_in, KH, KW = params["enc_w"].shape
    W_out = W - KW + 1
    Wp = W_out + 2 * (KW - 1)
    L = _round_up(K * Wp, 128)        # lane-pad hidden width to a vreg boundary
    we, be = _pack_encoder_weight(params["enc_w"].astype(jnp.float32),
                                  params["enc_b"].astype(jnp.float32),
                                  W, W_out, Wp, L)
    wd, bd = _pack_decoder_weight(params["dec_w"].astype(jnp.float32),
                                  params["dec_b"].astype(jnp.float32),
                                  W, Wp, L)
    return {"we": we, "be": be, "wd": wd, "bd": bd}


# ---------------------------------------------------------------------------
# Parameter init (deterministic, PyTorch-shaped / PyTorch conventions).
# ---------------------------------------------------------------------------
def _xavier_uniform(key, shape, gain):
    rf = shape[2] * shape[3]
    fan_in, fan_out = shape[1] * rf, shape[0] * rf
    bound = gain * (6.0 / (fan_in + fan_out)) ** 0.5
    return jax.random.uniform(key, shape, jnp.float32, -bound, bound)


def init_net_params(key, kernel_depth, channel_input=3, kernel_step=5):
    k0, k1, k2, k3 = jax.random.split(key, 4)
    gain = 5.0 / 3.0
    enc_w = _xavier_uniform(k0, (kernel_depth, channel_input, kernel_step, kernel_step), gain)
    dec_w = _xavier_uniform(k1, (kernel_depth, channel_input, kernel_step, kernel_step), gain)
    fan_in = channel_input * kernel_step * kernel_step
    enc_b = jax.random.uniform(k2, (kernel_depth,), jnp.float32,
                               -1.0 / fan_in ** 0.5, 1.0 / fan_in ** 0.5)
    dec_b = jax.random.uniform(k3, (channel_input,), jnp.float32,
                               -1.0 / fan_in ** 0.5, 1.0 / fan_in ** 0.5)
    return {"enc_w": enc_w, "enc_b": enc_b, "dec_w": dec_w, "dec_b": dec_b}


# ---------------------------------------------------------------------------
# Forward pass (mirrors Net.forward).  Input and output are NCHW.
# ---------------------------------------------------------------------------
def _num_batch_shards(n_images):
    # v7x has 2 TensorCores per chip -> shard the batch across them.
    # On v5e/v6e (single TC) extra grid steps only add pipeline overhead.
    try:
        kind = jax.devices()[0].device_kind.lower()
    except Exception:
        kind = ""
    if "v7" in kind and n_images >= 2 and n_images % 2 == 0:
        return 2
    return 1


@functools.partial(jax.jit, static_argnames=("beta",))
def net_forward(x_nchw, packed, beta=1.0):
    x = x_nchw.astype(jnp.float32)
    N, C_in, H, W = x.shape
    CW = C_in * W
    KH = packed["we"].shape[0] // CW        # square kernel (kernel_step)
    L = packed["we"].shape[1]               # lane-padded hidden width

    # NHWC-flat input rows: lane index c*W + x matches the banded-weight rows.
    x_flat = x.transpose(0, 2, 1, 3).reshape(N, H, CW)

    G = _num_batch_shards(N)                # 2 on v7x, else 1
    Nsh = N // G

    kernel = _make_fused_kernel(Nsh, H, KH, L, CW, float(beta))
    out_flat = pl.pallas_call(
        kernel,
        out_shape=jax.ShapeDtypeStruct((N * H, CW), jnp.float32),
        grid=(G,),
        in_specs=[
            pl.BlockSpec((Nsh, H, CW), lambda i: (i, 0, 0)),
            pl.BlockSpec((KH * CW, L), lambda i: (0, 0)),
            pl.BlockSpec((KH * L, CW), lambda i: (0, 0)),
            pl.BlockSpec((1, L), lambda i: (0, 0)),
            pl.BlockSpec((1, CW), lambda i: (0, 0)),
        ],
        out_specs=pl.BlockSpec((Nsh * H, CW), lambda i: (i, 0)),
        compiler_params=pltpu.CompilerParams(
            dimension_semantics=(("parallel",) if G > 1 else ("arbitrary",))),
    )(x_flat, packed["we"], packed["wd"], packed["be"], packed["bd"])

    # lane-dense kernel output -> NCHW (layout plumbing in the wrapper)
    return out_flat.reshape(N, H, C_in, W).transpose(0, 2, 1, 3)


# ---------------------------------------------------------------------------
# Pure-XLA reference (only used for the correctness check in __main__).
# ---------------------------------------------------------------------------
def _ref_forward(x, params, beta):
    hi = jax.lax.Precision.HIGHEST
    h = jax.lax.conv_general_dilated(
        x, params["enc_w"], (1, 1), "VALID",
        dimension_numbers=("NCHW", "OIHW", "NCHW"), precision=hi)
    h = jnp.tanh(beta * (h + params["enc_b"][None, :, None, None])) / beta
    wd = params["dec_w"]
    KH, KW = wd.shape[2], wd.shape[3]
    hp = jnp.pad(h, ((0, 0), (0, 0), (KH - 1, KH - 1), (KW - 1, KW - 1)))
    w_full = jnp.transpose(wd[:, :, ::-1, ::-1], (1, 0, 2, 3))   # (C, K, KH, KW)
    r = jax.lax.conv_general_dilated(
        hp, w_full, (1, 1), "VALID",
        dimension_numbers=("NCHW", "OIHW", "NCHW"), precision=hi)
    return r + params["dec_b"][None, :, None, None]


if __name__ == "__main__":
    key = jax.random.PRNGKey(0)
    k_params, k_x = jax.random.split(key)

    batch, channel_input, spatial = 2, 3, 16
    kernel_depth, kernel_step, beta = 4, 5, 1.0

    params = init_net_params(k_params, kernel_depth, channel_input, kernel_step)
    x = jax.random.normal(k_x, (batch, channel_input, spatial, spatial), jnp.float32)

    # Pack banded weights once (outside the per-call hot path), then run.
    packed = pack_net_params(params, spatial)
    out = net_forward(x, packed, beta=beta)
    jax.block_until_ready(out)
    assert out.shape == (batch, channel_input, spatial, spatial), out.shape

    ref = _ref_forward(x, params, beta)
    err = float(jnp.max(jnp.abs(out - ref)))
    assert jnp.allclose(out, ref, rtol=5e-2, atol=5e-2), f"max abs err {err}"
    print("KERNEL_OK")
</pallas_src>

<mosaic_0001>
module attributes {stable_mosaic.version = 11 : i64} {
  func.func @kernel(%arg0: i32, %arg1: memref<2x16x48xf32, #tpu.memory_space<vmem>>, %arg2: memref<240x128xf32, #tpu.memory_space<vmem>>, %arg3: memref<640x48xf32, #tpu.memory_space<vmem>>, %arg4: memref<1x128xf32, #tpu.memory_space<vmem>>, %arg5: memref<1x48xf32, #tpu.memory_space<vmem>>, %arg6: memref<32x48xf32, #tpu.memory_space<vmem>>) attributes {dimension_semantics = [#tpu.dimension_semantics<arbitrary>], iteration_bounds = array<i64: 1>, scalar_prefetch = 0 : i64, scratch_operands = 0 : i64, tpu.core_type = #tpu.core_type<tc>, window_params = [{transform_indices = @transform_0, window_bounds = array<i64: 2, 16, 48>}, {pipeline_mode = #tpu.pipeline_mode<synchronous>, transform_indices = @transform_1, window_bounds = array<i64: 240, 128>}, {pipeline_mode = #tpu.pipeline_mode<synchronous>, transform_indices = @transform_2, window_bounds = array<i64: 640, 48>}, {pipeline_mode = #tpu.pipeline_mode<synchronous>, transform_indices = @transform_3, window_bounds = array<i64: 1, 128>}, {pipeline_mode = #tpu.pipeline_mode<synchronous>, transform_indices = @transform_4, window_bounds = array<i64: 1, 48>}, {transform_indices = @transform_5, window_bounds = array<i64: 32, 48>}]} {
    %c0 = arith.constant 0 : index
    %c0_0 = arith.constant 0 : index
    %0 = vector.load %arg2[%c0, %c0_0] : memref<240x128xf32, #tpu.memory_space<vmem>>, vector<240x128xf32>
    %c0_1 = arith.constant 0 : index
    %c0_2 = arith.constant 0 : index
    %1 = vector.load %arg3[%c0_1, %c0_2] : memref<640x48xf32, #tpu.memory_space<vmem>>, vector<640x48xf32>
    %c0_3 = arith.constant 0 : index
    %c0_4 = arith.constant 0 : index
    %2 = vector.load %arg4[%c0_3, %c0_4] : memref<1x128xf32, #tpu.memory_space<vmem>>, vector<1x128xf32>
    %c0_5 = arith.constant 0 : index
    %c0_6 = arith.constant 0 : index
    %3 = vector.load %arg5[%c0_5, %c0_6] : memref<1x48xf32, #tpu.memory_space<vmem>>, vector<1x48xf32>
    %c0_7 = arith.constant 0 : index
    %c0_8 = arith.constant 0 : index
    %c0_9 = arith.constant 0 : index
    %4 = vector.load %arg1[%c0_7, %c0_8, %c0_9] : memref<2x16x48xf32, #tpu.memory_space<vmem>>, vector<1x12x48xf32>
    %5 = vector.shape_cast %4 : vector<1x12x48xf32> to vector<12x48xf32>
    %c0_10 = arith.constant 0 : index
    %c1 = arith.constant 1 : index
    %c0_11 = arith.constant 0 : index
    %6 = vector.load %arg1[%c0_10, %c1, %c0_11] : memref<2x16x48xf32, #tpu.memory_space<vmem>>, vector<1x12x48xf32>
    %7 = vector.shape_cast %6 : vector<1x12x48xf32> to vector<12x48xf32>
    %c0_12 = arith.constant 0 : index
    %c2 = arith.constant 2 : index
    %c0_13 = arith.constant 0 : index
    %8 = vector.load %arg1[%c0_12, %c2, %c0_13] : memref<2x16x48xf32, #tpu.memory_space<vmem>>, vector<1x12x48xf32>
    %9 = vector.shape_cast %8 : vector<1x12x48xf32> to vector<12x48xf32>
    %c0_14 = arith.constant 0 : index
    %c3 = arith.constant 3 : index
    %c0_15 = arith.constant 0 : index
    %10 = vector.load %arg1[%c0_14, %c3, %c0_15] : memref<2x16x48xf32, #tpu.memory_space<vmem>>, vector<1x12x48xf32>
    %11 = vector.shape_cast %10 : vector<1x12x48xf32> to vector<12x48xf32>
    %c0_16 = arith.constant 0 : index
    %c4 = arith.constant 4 : index
    %c0_17 = arith.constant 0 : index
    %12 = vector.load %arg1[%c0_16, %c4, %c0_17] : memref<2x16x48xf32, #tpu.memory_space<vmem>>, vector<1x12x48xf32>
    %13 = vector.shape_cast %12 : vector<1x12x48xf32> to vector<12x48xf32>
    %14 = tpu.concatenate %5, %7, %9, %11, %13 in 1 : vector<12x48xf32>, vector<12x48xf32>, vector<12x48xf32>, vector<12x48xf32>, vector<12x48xf32> -> vector<12x240xf32>
    %c1_18 = arith.constant 1 : index
    %c0_19 = arith.constant 0 : index
    %c0_20 = arith.constant 0 : index
    %15 = vector.load %arg1[%c1_18, %c0_19, %c0_20] : memref<2x16x48xf32, #tpu.memory_space<vmem>>, vector<1x12x48xf32>
    %16 = vector.shape_cast %15 : vector<1x12x48xf32> to vector<12x48xf32>
    %c1_21 = arith.constant 1 : index
    %c1_22 = arith.constant 1 : index
    %c0_23 = arith.constant 0 : index
    %17 = vector.load %arg1[%c1_21, %c1_22, %c0_23] : memref<2x16x48xf32, #tpu.memory_space<vmem>>, vector<1x12x48xf32>
    %18 = vector.shape_cast %17 : vector<1x12x48xf32> to vector<12x48xf32>
    %c1_24 = arith.constant 1 : index
    %c2_25 = arith.constant 2 : index
    %c0_26 = arith.constant 0 : index
    %19 = vector.load %arg1[%c1_24, %c2_25, %c0_26] : memref<2x16x48xf32, #tpu.memory_space<vmem>>, vector<1x12x48xf32>
    %20 = vector.shape_cast %19 : vector<1x12x48xf32> to vector<12x48xf32>
    %c1_27 = arith.constant 1 : index
    %c3_28 = arith.constant 3 : index
    %c0_29 = arith.constant 0 : index
    %21 = vector.load %arg1[%c1_27, %c3_28, %c0_29] : memref<2x16x48xf32, #tpu.memory_space<vmem>>, vector<1x12x48xf32>
    %22 = vector.shape_cast %21 : vector<1x12x48xf32> to vector<12x48xf32>
    %c1_30 = arith.constant 1 : index
    %c4_31 = arith.constant 4 : index
    %c0_32 = arith.constant 0 : index
    %23 = vector.load %arg1[%c1_30, %c4_31, %c0_32] : memref<2x16x48xf32, #tpu.memory_space<vmem>>, vector<1x12x48xf32>
    %24 = vector.shape_cast %23 : vector<1x12x48xf32> to vector<12x48xf32>
    %25 = tpu.concatenate %16, %18, %20, %22, %24 in 1 : vector<12x48xf32>, vector<12x48xf32>, vector<12x48xf32>, vector<12x48xf32>, vector<12x48xf32> -> vector<12x240xf32>
    %26 = tpu.concatenate %14, %25 in 0 : vector<12x240xf32>, vector<12x240xf32> -> vector<24x240xf32>
    %cst = arith.constant dense<0.000000e+00> : vector<24x128xf32>
    %27 = tpu.matmul %26, %0, %cst {dimension_numbers = #tpu.dot_dimension_numbers<[1], [0], [0], [1], [0, 0, 1, 1], [], []>} : vector<24x240xf32>, vector<240x128xf32>, vector<24x128xf32> -> vector<24x128xf32>
    %28 = vector.broadcast %2 : vector<1x128xf32> to vector<24x128xf32>
    %29 = arith.addf %27, %28 : vector<24x128xf32>
    %30 = math.tanh %29 : vector<24x128xf32>
    %cst_33 = arith.constant 0.000000e+00 : f32
    %31 = vector.broadcast %cst_33 : f32 to vector<4x128xf32>
    %32 = vector.extract_strided_slice %30 {offsets = [0, 0], sizes = [12, 128], strides = [1, 1]} : vector<24x128xf32> to vector<12x128xf32>
    %33 = vector.extract_strided_slice %30 {offsets = [12, 0], sizes = [12, 128], strides = [1, 1]} : vector<24x128xf32> to vector<12x128xf32>
    %34 = tpu.concatenate %31, %32, %31, %31, %33, %31 in 0 : vector<4x128xf32>, vector<12x128xf32>, vector<4x128xf32>, vector<4x128xf32>, vector<12x128xf32>, vector<4x128xf32> -> vector<40x128xf32>
    %35 = vector.extract_strided_slice %34 {offsets = [0, 0], sizes = [16, 128], strides = [1, 1]} : vector<40x128xf32> to vector<16x128xf32>
    %36 = vector.extract_strided_slice %34 {offsets = [1, 0], sizes = [16, 128], strides = [1, 1]} : vector<40x128xf32> to vector<16x128xf32>
    %37 = vector.extract_strided_slice %34 {offsets = [2, 0], sizes = [16, 128], strides = [1, 1]} : vector<40x128xf32> to vector<16x128xf32>
    %38 = vector.extract_strided_slice %34 {offsets = [3, 0], sizes = [16, 128], strides = [1, 1]} : vector<40x128xf32> to vector<16x128xf32>
    %39 = vector.extract_strided_slice %34 {offsets = [4, 0], sizes = [16, 128], strides = [1, 1]} : vector<40x128xf32> to vector<16x128xf32>
    %40 = tpu.concatenate %35, %36, %37, %38, %39 in 1 : vector<16x128xf32>, vector<16x128xf32>, vector<16x128xf32>, vector<16x128xf32>, vector<16x128xf32> -> vector<16x640xf32>
    %41 = vector.extract_strided_slice %34 {offsets = [20, 0], sizes = [16, 128], strides = [1, 1]} : vector<40x128xf32> to vector<16x128xf32>
    %42 = vector.extract_strided_slice %34 {offsets = [21, 0], sizes = [16, 128], strides = [1, 1]} : vector<40x128xf32> to vector<16x128xf32>
    %43 = vector.extract_strided_slice %34 {offsets = [22, 0], sizes = [16, 128], strides = [1, 1]} : vector<40x128xf32> to vector<16x128xf32>
    %44 = vector.extract_strided_slice %34 {offsets = [23, 0], sizes = [16, 128], strides = [1, 1]} : vector<40x128xf32> to vector<16x128xf32>
    %45 = vector.extract_strided_slice %34 {offsets = [24, 0], sizes = [16, 128], strides = [1, 1]} : vector<40x128xf32> to vector<16x128xf32>
    %46 = tpu.concatenate %41, %42, %43, %44, %45 in 1 : vector<16x128xf32>, vector<16x128xf32>, vector<16x128xf32>, vector<16x128xf32>, vector<16x128xf32> -> vector<16x640xf32>
    %47 = tpu.concatenate %40, %46 in 0 : vector<16x640xf32>, vector<16x640xf32> -> vector<32x640xf32>
    %cst_34 = arith.constant dense<0.000000e+00> : vector<32x48xf32>
    %48 = tpu.matmul %47, %1, %cst_34 {dimension_numbers = #tpu.dot_dimension_numbers<[1], [0], [0], [1], [0, 0, 1, 1], [], []>} : vector<32x640xf32>, vector<640x48xf32>, vector<32x48xf32> -> vector<32x48xf32>
    %49 = vector.broadcast %3 : vector<1x48xf32> to vector<32x48xf32>
    %50 = arith.addf %48, %49 : vector<32x48xf32>
    %c0_35 = arith.constant 0 : index
    %c0_36 = arith.constant 0 : index
    %51 = vector.load %arg6[%c0_35, %c0_36] : memref<32x48xf32, #tpu.memory_space<vmem>>, vector<32x48xf32>
    tpu.vector_store %arg6[%c0_35, %c0_36], %50 {strides = array<i32>} : memref<32x48xf32, #tpu.memory_space<vmem>>, vector<32x48xf32>,
    return
  }
  func.func @transform_0(%arg0: i32) -> (i32, i32, i32) {
    %c0_i32 = arith.constant 0 : i32
    %c0_i32_0 = arith.constant 0 : i32
    %c0_i32_1 = arith.constant 0 : i32
    return %arg0, %c0_i32, %c0_i32_0 : i32, i32, i32
  }
  func.func @transform_1(%arg0: i32) -> (i32, i32) {
    %c0_i32 = arith.constant 0 : i32
    %c0_i32_0 = arith.constant 0 : i32
    %c0_i32_1 = arith.constant 0 : i32
    return %c0_i32, %c0_i32_0 : i32, i32
  }
  func.func @transform_2(%arg0: i32) -> (i32, i32) {
    %c0_i32 = arith.constant 0 : i32
    %c0_i32_0 = arith.constant 0 : i32
    %c0_i32_1 = arith.constant 0 : i32
    return %c0_i32, %c0_i32_0 : i32, i32
  }
  func.func @transform_3(%arg0: i32) -> (i32, i32) {
    %c0_i32 = arith.constant 0 : i32
    %c0_i32_0 = arith.constant 0 : i32
    %c0_i32_1 = arith.constant 0 : i32
    return %c0_i32, %c0_i32_0 : i32, i32
  }
  func.func @transform_4(%arg0: i32) -> (i32, i32) {
    %c0_i32 = arith.constant 0 : i32
    %c0_i32_0 = arith.constant 0 : i32
    %c0_i32_1 = arith.constant 0 : i32
    return %c0_i32, %c0_i32_0 : i32, i32
  }
  func.func @transform_5(%arg0: i32) -> (i32, i32) {
    %c0_i32 = arith.constant 0 : i32
    %c0_i32_0 = arith.constant 0 : i32
    return %arg0, %c0_i32 : i32, i32
  }
}

</mosaic_0001>

<llo_original>
// kernel: net_forward.1
$region0: #{net_forward.1}
  #allocation0 [shape = 'u32[]', space=smem, size = 0x4, offset = 0x4, fixed_abs, tag = 'smem constant byte address 0x4 - core index']
  #allocation1 [shape = 'u32[72,128]{1,0:T(1,128)}', space=vmem, size = 0x9000, scoped, tag = 'internal scratch']
  %s0 = inlined_call_operand.vmem [shape: f32[2,16,48], index: 0, kind: input, shape index: {}]
  %s1 = inlined_call_operand.vmem [shape: f32[240,128], index: 1, kind: input, shape index: {}]
  %s2 = inlined_call_operand.vmem [shape: f32[640,48], index: 2, kind: input, shape index: {}]
  %s3 = inlined_call_operand.vmem [shape: f32[1,128], index: 3, kind: input, shape index: {}]
  %s4 = inlined_call_operand.vmem [shape: f32[1,48], index: 4, kind: input, shape index: {}]
  %s5 = inlined_call_operand.vmem [shape: f32[32,48], index: 5, kind: output, shape index: {}]
  %s6 = sld [smem:[#allocation0]]
  $region30: #{net_forward.1} parent=0
    _
  %s8 = ssub.s32 1, %s6
  %s9 = scalar_select 0, %s8, %s6
  // Predicated region
  $region2: #{net_forward.1} parent=0 // pred_check
    _
  $region3: #{net_forward.1} parent=0 // pred_check_branch
    %11 = sbr.rel (0) target = $region5
  $region4: #{net_forward.1} parent=0 // pred_region
    _
  $region5: #{net_forward.1} parent=0 // pred_fallthru
    _
  // Predicated region
  $region6: #{net_forward.1} parent=0 // pred_check
    _
  $region7: #{net_forward.1} parent=0 // pred_check_branch
    %13 = sbr.rel (0) target = $region9
  $region8: #{net_forward.1} parent=0 // pred_region
    _
  $region9: #{net_forward.1} parent=0 // pred_fallthru
    _
  // Predicated region
  $region10: #{net_forward.1} parent=0 // pred_check
    _
  $region11: #{net_forward.1} parent=0 // pred_check_branch
    %15 = sbr.rel (0) target = $region13
  $region12: #{net_forward.1} parent=0 // pred_region
    _
  $region13: #{net_forward.1} parent=0 // pred_fallthru
    _
  // Predicated region
  $region14: #{net_forward.1} parent=0 // pred_check
    _
  $region15: #{net_forward.1} parent=0 // pred_check_branch
    %17 = sbr.rel (0) target = $region17
  $region16: #{net_forward.1} parent=0 // pred_region
    _
  $region17: #{net_forward.1} parent=0 // pred_fallthru
    _
  // Predicated region
  $region18: #{net_forward.1} parent=0 // pred_check
    _
  $region19: #{net_forward.1} parent=0 // pred_check_branch
    %19 = sbr.rel (0) target = $region21
  $region20: #{net_forward.1} parent=0 // pred_region
    _
  $region21: #{net_forward.1} parent=0 // pred_fallthru
    _
  %v20 = vld [vmem:[%s1] sm:$0xff]
  %v21 = vld [vmem:[%s1 + $0x8] sm:$0xff]
  %v22 = vld [vmem:[%s1 + $0x10] sm:$0xff]
  %v23 = vld [vmem:[%s1 + $0x18] sm:$0xff]
  %v24 = vld [vmem:[%s1 + $0x20] sm:$0xff]
  %v25 = vld [vmem:[%s1 + $0x28] sm:$0xff]
  %v26 = vld [vmem:[%s1 + $0x30] sm:$0xff]
  %v27 = vld [vmem:[%s1 + $0x38] sm:$0xff]
  %v28 = vld [vmem:[%s1 + $0x40] sm:$0xff]
  %v29 = vld [vmem:[%s1 + $0x48] sm:$0xff]
  %v30 = vld [vmem:[%s1 + $0x50] sm:$0xff]
  %v31 = vld [vmem:[%s1 + $0x58] sm:$0xff]
  %v32 = vld [vmem:[%s1 + $0x60] sm:$0xff]
  %v33 = vld [vmem:[%s1 + $0x68] sm:$0xff]
  %v34 = vld [vmem:[%s1 + $0x70] sm:$0xff]
  %v35 = vld [vmem:[%s1 + $0x78] sm:$0xff]
  %v36 = vld [vmem:[%s1 + $0x80] sm:$0xff]
  %v37 = vld [vmem:[%s1 + $0x88] sm:$0xff]
  %v38 = vld [vmem:[%s1 + $0x90] sm:$0xff]
  %v39 = vld [vmem:[%s1 + $0x98] sm:$0xff]
  %v40 = vld [vmem:[%s1 + $0xa0] sm:$0xff]
  %v41 = vld [vmem:[%s1 + $0xa8] sm:$0xff]
  %v42 = vld [vmem:[%s1 + $0xb0] sm:$0xff]
  %v43 = vld [vmem:[%s1 + $0xb8] sm:$0xff]
  %v44 = vld [vmem:[%s1 + $0xc0] sm:$0xff]
  %v45 = vld [vmem:[%s1 + $0xc8] sm:$0xff]
  %v46 = vld [vmem:[%s1 + $0xd0] sm:$0xff]
  %v47 = vld [vmem:[%s1 + $0xd8] sm:$0xff]
  %v48 = vld [vmem:[%s1 + $0xe0] sm:$0xff]
  %v49 = vld [vmem:[%s1 + $0xe8] sm:$0xff]
  %v50 = vld [vmem:[%s2] sm:$0xff]
  %v51 = vld [vmem:[%s2 + $0x8] sm:$0xff]
  %v52 = vld [vmem:[%s2 + $0x10] sm:$0xff]
  %v53 = vld [vmem:[%s2 + $0x18] sm:$0xff]
  %v54 = vld [vmem:[%s2 + $0x20] sm:$0xff]
  %v55 = vld [vmem:[%s2 + $0x28] sm:$0xff]
  %v56 = vld [vmem:[%s2 + $0x30] sm:$0xff]
  %v57 = vld [vmem:[%s2 + $0x38] sm:$0xff]
  %v58 = vld [vmem:[%s2 + $0x40] sm:$0xff]
  %v59 = vld [vmem:[%s2 + $0x48] sm:$0xff]
  %v60 = vld [vmem:[%s2 + $0x50] sm:$0xff]
  %v61 = vld [vmem:[%s2 + $0x58] sm:$0xff]
  %v62 = vld [vmem:[%s2 + $0x60] sm:$0xff]
  %v63 = vld [vmem:[%s2 + $0x68] sm:$0xff]
  %v64 = vld [vmem:[%s2 + $0x70] sm:$0xff]
  %v65 = vld [vmem:[%s2 + $0x78] sm:$0xff]
  %v66 = vld [vmem:[%s2 + $0x80] sm:$0xff]
  %v67 = vld [vmem:[%s2 + $0x88] sm:$0xff]
  %v68 = vld [vmem:[%s2 + $0x90] sm:$0xff]
  %v69 = vld [vmem:[%s2 + $0x98] sm:$0xff]
  %v70 = vld [vmem:[%s2 + $0xa0] sm:$0xff]
  %v71 = vld [vmem:[%s2 + $0xa8] sm:$0xff]
  %v72 = vld [vmem:[%s2 + $0xb0] sm:$0xff]
  %v73 = vld [vmem:[%s2 + $0xb8] sm:$0xff]
  %v74 = vld [vmem:[%s2 + $0xc0] sm:$0xff]
  %v75 = vld [vmem:[%s2 + $0xc8] sm:$0xff]
  %v76 = vld [vmem:[%s2 + $0xd0] sm:$0xff]
  %v77 = vld [vmem:[%s2 + $0xd8] sm:$0xff]
  %v78 = vld [vmem:[%s2 + $0xe0] sm:$0xff]
  %v79 = vld [vmem:[%s2 + $0xe8] sm:$0xff]
  %v80 = vld [vmem:[%s2 + $0xf0] sm:$0xff]
  %v81 = vld [vmem:[%s2 + $0xf8] sm:$0xff]
  %v82 = vld [vmem:[%s2 + $0x100] sm:$0xff]
  %v83 = vld [vmem:[%s2 + $0x108] sm:$0xff]
  %v84 = vld [vmem:[%s2 + $0x110] sm:$0xff]
  %v85 = vld [vmem:[%s2 + $0x118] sm:$0xff]
  %v86 = vld [vmem:[%s2 + $0x120] sm:$0xff]
  %v87 = vld [vmem:[%s2 + $0x128] sm:$0xff]
  %v88 = vld [vmem:[%s2 + $0x130] sm:$0xff]
  %v89 = vld [vmem:[%s2 + $0x138] sm:$0xff]
  %v90 = vld [vmem:[%s2 + $0x140] sm:$0xff]
  %v91 = vld [vmem:[%s2 + $0x148] sm:$0xff]
  %v92 = vld [vmem:[%s2 + $0x150] sm:$0xff]
  %v93 = vld [vmem:[%s2 + $0x158] sm:$0xff]
  %v94 = vld [vmem:[%s2 + $0x160] sm:$0xff]
  %v95 = vld [vmem:[%s2 + $0x168] sm:$0xff]
  %v96 = vld [vmem:[%s2 + $0x170] sm:$0xff]
  %v97 = vld [vmem:[%s2 + $0x178] sm:$0xff]
  %v98 = vld [vmem:[%s2 + $0x180] sm:$0xff]
  %v99 = vld [vmem:[%s2 + $0x188] sm:$0xff]
  %v100 = vld [vmem:[%s2 + $0x190] sm:$0xff]
  %v101 = vld [vmem:[%s2 + $0x198] sm:$0xff]
  %v102 = vld [vmem:[%s2 + $0x1a0] sm:$0xff]
  %v103 = vld [vmem:[%s2 + $0x1a8] sm:$0xff]
  %v104 = vld [vmem:[%s2 + $0x1b0] sm:$0xff]
  %v105 = vld [vmem:[%s2 + $0x1b8] sm:$0xff]
  %v106 = vld [vmem:[%s2 + $0x1c0] sm:$0xff]
  %v107 = vld [vmem:[%s2 + $0x1c8] sm:$0xff]
  %v108 = vld [vmem:[%s2 + $0x1d0] sm:$0xff]
  %v109 = vld [vmem:[%s2 + $0x1d8] sm:$0xff]
  %v110 = vld [vmem:[%s2 + $0x1e0] sm:$0xff]
  %v111 = vld [vmem:[%s2 + $0x1e8] sm:$0xff]
  %v112 = vld [vmem:[%s2 + $0x1f0] sm:$0xff]
  %v113 = vld [vmem:[%s2 + $0x1f8] sm:$0xff]
  %v114 = vld [vmem:[%s2 + $0x200] sm:$0xff]
  %v115 = vld [vmem:[%s2 + $0x208] sm:$0xff]
  %v116 = vld [vmem:[%s2 + $0x210] sm:$0xff]
  %v117 = vld [vmem:[%s2 + $0x218] sm:$0xff]
  %v118 = vld [vmem:[%s2 + $0x220] sm:$0xff]
  %v119 = vld [vmem:[%s2 + $0x228] sm:$0xff]
  %v120 = vld [vmem:[%s2 + $0x230] sm:$0xff]
  %v121 = vld [vmem:[%s2 + $0x238] sm:$0xff]
  %v122 = vld [vmem:[%s2 + $0x240] sm:$0xff]
  %v123 = vld [vmem:[%s2 + $0x248] sm:$0xff]
  %v124 = vld [vmem:[%s2 + $0x250] sm:$0xff]
  %v125 = vld [vmem:[%s2 + $0x258] sm:$0xff]
  %v126 = vld [vmem:[%s2 + $0x260] sm:$0xff]
  %v127 = vld [vmem:[%s2 + $0x268] sm:$0xff]
  %v128 = vld [vmem:[%s2 + $0x270] sm:$0xff]
  %v129 = vld [vmem:[%s2 + $0x278] sm:$0xff]
  %v130 = vld [vmem:[%s3] sm:$0x1]
  %v131 = vld [vmem:[%s4] sm:$0x1]
  %v132 = vld [vmem:[%s0] sm:$0xff]
  %v133 = vld [vmem:[%s0 + $0x8] sm:$0xf]
  %v134 = vld [vmem:[%s0 + $0x1] sm:$0xff]
  %v135 = vld [vmem:[%s0 + $0x9] sm:$0xf]
  %v136 = vld [vmem:[%s0 + $0x2] sm:$0xff]
  %v137 = vld [vmem:[%s0 + $0xa] sm:$0xf]
  %v138 = vld [vmem:[%s0 + $0x3] sm:$0xff]
  %v139 = vld [vmem:[%s0 + $0xb] sm:$0xf]
  %v140 = vld [vmem:[%s0 + $0x4] sm:$0xff]
  %v141 = vld [vmem:[%s0 + $0xc] sm:$0xf]
  %144 = vrot.lane.b32.xlu0 %v134, 48
  %v145 = vpop.permute.xlu0 %144
  %146 = vrot.lane.b32.xlu0 %v135, 48
  %v147 = vpop.permute.xlu0 %146
  %152 = vrot.lane.b32.xlu0 %v136, 96
  %v153 = vpop.permute.xlu0 %152
  %154 = vrot.lane.b32.xlu0 %v137, 96
  %v155 = vpop.permute.xlu0 %154
  %160 = vrot.lane.b32.xlu0 %v138, 16
  %v161 = vpop.permute.xlu0 %160
  %162 = vrot.lane.b32.xlu0 %v139, 16
  %v163 = vpop.permute.xlu0 %162
  %168 = vrot.lane.b32.xlu0 %v140, 64
  %v169 = vpop.permute.xlu0 %168
  %170 = vrot.lane.b32.xlu0 %v141, 64
  %v171 = vpop.permute.xlu0 %170
  %vm174 = vcmask 392192
  %v175 = vsel %vm174, %v132, %v145
  %v176 = vsel %vm174, %v133, %v147
  %vm177 = vcmask 785408
  %v178 = vsel %vm177, %v175, %v153
  %v179 = vsel %vm177, %v176, %v155
  %vm180 = vcmask 130048
  %v181 = vsel %vm180, %v153, %v161
  %v182 = vsel %vm180, %v155, %v163
  %vm183 = vcmask 523264
  %v184 = vsel %vm183, %v181, %v169
  %v185 = vsel %vm183, %v182, %v171
  %s186 = scalar_lea.vmem %s0, 16
  %v187 = vld [vmem:[%s186] sm:$0xff]
  %v188 = vld [vmem:[%s186 + $0x8] sm:$0xf]
  %v189 = vld [vmem:[%s186 + $0x1] sm:$0xff]
  %v190 = vld [vmem:[%s186 + $0x9] sm:$0xf]
  %v191 = vld [vmem:[%s186 + $0x2] sm:$0xff]
  %v192 = vld [vmem:[%s186 + $0xa] sm:$0xf]
  %v193 = vld [vmem:[%s186 + $0x3] sm:$0xff]
  %v194 = vld [vmem:[%s186 + $0xb] sm:$0xf]
  %v195 = vld [vmem:[%s186 + $0x4] sm:$0xff]
  %v196 = vld [vmem:[%s186 + $0xc] sm:$0xf]
  %199 = vrot.lane.b32.xlu0 %v189, 48
  %v200 = vpop.permute.xlu0 %199
  %201 = vrot.lane.b32.xlu0 %v190, 48
  %v202 = vpop.permute.xlu0 %201
  %207 = vrot.lane.b32.xlu0 %v191, 96
  %v208 = vpop.permute.xlu0 %207
  %209 = vrot.lane.b32.xlu0 %v192, 96
  %v210 = vpop.permute.xlu0 %209
  %215 = vrot.lane.b32.xlu0 %v193, 16
  %v216 = vpop.permute.xlu0 %215
  %217 = vrot.lane.b32.xlu0 %v194, 16
  %v218 = vpop.permute.xlu0 %217
  %223 = vrot.lane.b32.xlu0 %v195, 64
  %v224 = vpop.permute.xlu0 %223
  %225 = vrot.lane.b32.xlu0 %v196, 64
  %v226 = vpop.permute.xlu0 %225
  %v229 = vsel %vm174, %v187, %v200
  %v230 = vsel %vm174, %v188, %v202
  %v231 = vsel %vm177, %v229, %v208
  %v232 = vsel %vm177, %v230, %v210
  %v233 = vsel %vm180, %v208, %v216
  %v234 = vsel %vm180, %v210, %v218
  %v235 = vsel %vm183, %v233, %v224
  %v236 = vsel %vm183, %v234, %v226
  %vm241 = vcmask 1043456
  %v242 = vrot.slane %v231, 4
  %v243 = vrot.slane %v235, 4
  %v244 = vrot.slane %v232, 4
  %v245 = vsel %vm241, %v242, %v244
  %v246 = vrot.slane %v236, 4
  %v247 = vsel %vm241, %v243, %v246
  %v251 = vsel %vm241, %v179, %v242
  %v252 = vsel %vm241, %v185, %v243
  %v254 = vperm.slane %v130, 0
  %vm256 = vcmask 916480
  %v258 = vsel %vm256, %v184, 0
  %v261 = vsel %vm256, %v252, 0
  %v263 = vsel %vm256, %v247, 0
  %265 = vmatpush.msra.mxu0 %v35
  %266 = vmatpush.msra.mxu0 %v34
  %267 = vmatpush.msra.mxu0 %v33
  %268 = vmatpush.msra.mxu0 %v32
  %269 = vmatpush.msra.mxu0 %v31
  %270 = vmatpush.msra.mxu0 %v30
  %271 = vmatpush.msra.mxu0 %v29
  %272 = vmatpush.msra.mxu0 %v28
  %273 = vmatpush.msra.mxu0 %v27
  %274 = vmatpush.msra.mxu0 %v26
  %275 = vmatpush.msra.mxu0 %v25
  %276 = vmatpush.msra.mxu0 %v24
  %277 = vmatpush.msra.mxu0 %v23
  %278 = vmatpush.msra.mxu0 %v22
  %279 = vmatpush.msra.mxu0 %v21
  %280 = vmatpush.msra.mxu0 %v20
  %281 = vmatmul.f32.gmra.mxu0 %v178
  %v282 = vpop.f32.mrf.mxu0
  %v283 = vadd.f32 %v254, %v282
  %284 = vmatmul.f32.gmra.mxu0 %v251
  %v285 = vpop.f32.mrf.mxu0
  %v286 = vadd.f32 %v254, %v285
  %287 = vmatmul.f32.gmra.mxu0 %v245
  %v288 = vpop.f32.mrf.mxu0
  %v289 = vadd.f32 %v254, %v288
  %290 = vdwg.mxu0
  %291 = vmatpush.msra.mxu0 0.0
  %292 = vmatpush.msra.mxu0 0.0
  %293 = vmatpush.msra.mxu0 %v49
  %294 = vmatpush.msra.mxu0 %v48
  %295 = vmatpush.msra.mxu0 %v47
  %296 = vmatpush.msra.mxu0 %v46
  %297 = vmatpush.msra.mxu0 %v45
  %298 = vmatpush.msra.mxu0 %v44
  %299 = vmatpush.msra.mxu0 %v43
  %300 = vmatpush.msra.mxu0 %v42
  %301 = vmatpush.msra.mxu0 %v41
  %302 = vmatpush.msra.mxu0 %v40
  %303 = vmatpush.msra.mxu0 %v39
  %304 = vmatpush.msra.mxu0 %v38
  %305 = vmatpush.msra.mxu0 %v37
  %306 = vmatpush.msra.mxu0 %v36
  %307 = vmatmul.f32.gmra.mxu0 %v258
  %v308 = vpop.f32.mrf.mxu0
  %v309 = vadd.f32 %v283, %v308
  %310 = vmatmul.f32.gmra.mxu0 %v261
  %v311 = vpop.f32.mrf.mxu0
  %v312 = vadd.f32 %v286, %v311
  %313 = vmatmul.f32.gmra.mxu0 %v263
  %v314 = vpop.f32.mrf.mxu0
  %v315 = vadd.f32 %v289, %v314
  %316 = vdwg.mxu0
  %v317 = vtanh.pop %v309
  %v318 = vtanh.pop %v312
  %v319 = vtanh.pop %v315
  %v322 = vrot.slane %v317, 4
  %v323 = vrot.slane %v318, 4
  %v324 = vsel %vm241, %v322, %v323
  %v328 = vrot.slane %v319, 4
  %v329 = vsel %vm241, %v323, %v328
  %v331 = vsel %vm241, 0.0, %v322
  %v332 = vsel %vm241, %v328, 0.0
  %vm335 = vcmask 1046528
  %v336 = vrot.slane %v331, 1
  %v337 = vrot.slane %v324, 1
  %v338 = vsel %vm335, %v336, %v337
  %v339 = vrot.slane 0.0, 1
  %v340 = vsel %vm335, %v337, %v339
  %vm343 = vcmask 1045504
  %v344 = vrot.slane %v331, 2
  %v345 = vrot.slane %v324, 2
  %v346 = vsel %vm343, %v344, %v345
  %v347 = vrot.slane 0.0, 2
  %v348 = vsel %vm343, %v345, %v347
  %vm351 = vcmask 1044480
  %v352 = vrot.slane %v331, 3
  %v353 = vrot.slane %v324, 3
  %v354 = vsel %vm351, %v352, %v353
  %v355 = vrot.slane 0.0, 3
  %v356 = vsel %vm351, %v353, %v355
  %v359 = vrot.slane %v331, 4
  %v360 = vrot.slane %v324, 4
  %v361 = vsel %vm241, %v359, %v360
  %v362 = vrot.slane 0.0, 4
  %v363 = vsel %vm241, %v360, %v362
  %v367 = vrot.slane %v329, 1
  %v368 = vsel %vm335, %v339, %v367
  %v369 = vrot.slane %v332, 1
  %v370 = vsel %vm335, %v367, %v369
  %v371 = vrot.slane %v329, 2
  %v372 = vsel %vm343, %v347, %v371
  %v373 = vrot.slane %v332, 2
  %v374 = vsel %vm343, %v371, %v373
  %v375 = vrot.slane %v329, 3
  %v376 = vsel %vm351, %v355, %v375
  %v377 = vrot.slane %v332, 3
  %v378 = vsel %vm351, %v375, %v377
  %v379 = vrot.slane %v329, 4
  %v380 = vrot.slane %v332, 4
  %v381 = vsel %vm241, %v379, %v380
  %v382 = vsel %vm241, %v362, %v379
  %v383 = vrot.slane %v368, 4
  %v384 = vrot.slane %v370, 4
  %v385 = vsel %vm241, %v383, %v384
  %v386 = vrot.slane %v372, 4
  %v387 = vrot.slane %v374, 4
  %v388 = vsel %vm241, %v386, %v387
  %v389 = vrot.slane %v376, 4
  %v390 = vrot.slane %v378, 4
  %v391 = vsel %vm241, %v389, %v390
  %v392 = vrot.slane %v379, 4
  %v393 = vrot.slane %v381, 4
  %v394 = vsel %vm241, %v392, %v393
  %v395 = vrot.slane %v369, 4
  %v396 = vsel %vm241, %v384, %v395
  %v397 = vrot.slane %v373, 4
  %v398 = vsel %vm241, %v387, %v397
  %v399 = vrot.slane %v377, 4
  %v400 = vsel %vm241, %v390, %v399
  %v401 = vrot.slane %v380, 4
  %v402 = vsel %vm241, %v393, %v401
  %v414 = vperm.slane %v131, 0
  %416 = vmatpush.msra.mxu0 %v65
  %417 = vmatpush.msra.mxu0 %v64
  %418 = vmatpush.msra.mxu0 %v63
  %419 = vmatpush.msra.mxu0 %v62
  %420 = vmatpush.msra.mxu0 %v61
  %421 = vmatpush.msra.mxu0 %v60
  %422 = vmatpush.msra.mxu0 %v59
  %423 = vmatpush.msra.mxu0 %v58
  %424 = vmatpush.msra.mxu0 %v57
  %425 = vmatpush.msra.mxu0 %v56
  %426 = vmatpush.msra.mxu0 %v55
  %427 = vmatpush.msra.mxu0 %v54
  %428 = vmatpush.msra.mxu0 %v53
  %429 = vmatpush.msra.mxu0 %v52
  %430 = vmatpush.msra.mxu0 %v51
  %431 = vmatpush.msra.mxu0 %v50
  %432 = vmatmul.f32.gmra.mxu0 %v331
  %v433 = vpop.f32.mrf.mxu0
  %v434 = vadd.f32 %v414, %v433
  %435 = vmatmul.f32.gmra.mxu0 %v324
  %v436 = vpop.f32.mrf.mxu0
  %v437 = vadd.f32 %v414, %v436
  %438 = vmatmul.f32.gmra.mxu0 %v382
  %v439 = vpop.f32.mrf.mxu0
  %v440 = vadd.f32 %v414, %v439
  %441 = vmatmul.f32.gmra.mxu0 %v381
  %v442 = vpop.f32.mrf.mxu0
  %v443 = vadd.f32 %v414, %v442
  %444 = vdwg.mxu0
  %445 = vmatpush.msra.mxu0 %v81
  %446 = vmatpush.msra.mxu0 %v80
  %447 = vmatpush.msra.mxu0 %v79
  %448 = vmatpush.msra.mxu0 %v78
  %449 = vmatpush.msra.mxu0 %v77
  %450 = vmatpush.msra.mxu0 %v76
  %451 = vmatpush.msra.mxu0 %v75
  %452 = vmatpush.msra.mxu0 %v74
  %453 = vmatpush.msra.mxu0 %v73
  %454 = vmatpush.msra.mxu0 %v72
  %455 = vmatpush.msra.mxu0 %v71
  %456 = vmatpush.msra.mxu0 %v70
  %457 = vmatpush.msra.mxu0 %v69
  %458 = vmatpush.msra.mxu0 %v68
  %459 = vmatpush.msra.mxu0 %v67
  %460 = vmatpush.msra.mxu0 %v66
  %461 = vmatmul.f32.gmra.mxu0 %v338
  %v462 = vpop.f32.mrf.mxu0
  %v463 = vadd.f32 %v434, %v462
  %464 = vmatmul.f32.gmra.mxu0 %v340
  %v465 = vpop.f32.mrf.mxu0
  %v466 = vadd.f32 %v437, %v465
  %467 = vmatmul.f32.gmra.mxu0 %v385
  %v468 = vpop.f32.mrf.mxu0
  %v469 = vadd.f32 %v440, %v468
  %470 = vmatmul.f32.gmra.mxu0 %v396
  %v471 = vpop.f32.mrf.mxu0
  %v472 = vadd.f32 %v443, %v471
  %473 = vdwg.mxu0
  %474 = vmatpush.msra.mxu0 %v97
  %475 = vmatpush.msra.mxu0 %v96
  %476 = vmatpush.msra.mxu0 %v95
  %477 = vmatpush.msra.mxu0 %v94
  %478 = vmatpush.msra.mxu0 %v93
  %479 = vmatpush.msra.mxu0 %v92
  %480 = vmatpush.msra.mxu0 %v91
  %481 = vmatpush.msra.mxu0 %v90
  %482 = vmatpush.msra.mxu0 %v89
  %483 = vmatpush.msra.mxu0 %v88
  %484 = vmatpush.msra.mxu0 %v87
  %485 = vmatpush.msra.mxu0 %v86
  %486 = vmatpush.msra.mxu0 %v85
  %487 = vmatpush.msra.mxu0 %v84
  %488 = vmatpush.msra.mxu0 %v83
  %489 = vmatpush.msra.mxu0 %v82
  %490 = vmatmul.f32.gmra.mxu0 %v346
  %v491 = vpop.f32.mrf.mxu0
  %v492 = vadd.f32 %v463, %v491
  %493 = vmatmul.f32.gmra.mxu0 %v348
  %v494 = vpop.f32.mrf.mxu0
  %v495 = vadd.f32 %v466, %v494
  %496 = vmatmul.f32.gmra.mxu0 %v388
  %v497 = vpop.f32.mrf.mxu0
  %v498 = vadd.f32 %v469, %v497
  %499 = vmatmul.f32.gmra.mxu0 %v398
  %v500 = vpop.f32.mrf.mxu0
  %v501 = vadd.f32 %v472, %v500
  %502 = vdwg.mxu0
  %503 = vmatpush.msra.mxu0 %v113
  %504 = vmatpush.msra.mxu0 %v112
  %505 = vmatpush.msra.mxu0 %v111
  %506 = vmatpush.msra.mxu0 %v110
  %507 = vmatpush.msra.mxu0 %v109
  %508 = vmatpush.msra.mxu0 %v108
  %509 = vmatpush.msra.mxu0 %v107
  %510 = vmatpush.msra.mxu0 %v106
  %511 = vmatpush.msra.mxu0 %v105
  %512 = vmatpush.msra.mxu0 %v104
  %513 = vmatpush.msra.mxu0 %v103
  %514 = vmatpush.msra.mxu0 %v102
  %515 = vmatpush.msra.mxu0 %v101
  %516 = vmatpush.msra.mxu0 %v100
  %517 = vmatpush.msra.mxu0 %v99
  %518 = vmatpush.msra.mxu0 %v98
  %519 = vmatmul.f32.gmra.mxu0 %v354
  %v520 = vpop.f32.mrf.mxu0
  %v521 = vadd.f32 %v492, %v520
  %522 = vmatmul.f32.gmra.mxu0 %v356
  %v523 = vpop.f32.mrf.mxu0
  %v524 = vadd.f32 %v495, %v523
  %525 = vmatmul.f32.gmra.mxu0 %v391
  %v526 = vpop.f32.mrf.mxu0
  %v527 = vadd.f32 %v498, %v526
  %528 = vmatmul.f32.gmra.mxu0 %v400
  %v529 = vpop.f32.mrf.mxu0
  %v530 = vadd.f32 %v501, %v529
  %531 = vdwg.mxu0
  %532 = vmatpush.msra.mxu0 %v129
  %533 = vmatpush.msra.mxu0 %v128
  %534 = vmatpush.msra.mxu0 %v127
  %535 = vmatpush.msra.mxu0 %v126
  %536 = vmatpush.msra.mxu0 %v125
  %537 = vmatpush.msra.mxu0 %v124
  %538 = vmatpush.msra.mxu0 %v123
  %539 = vmatpush.msra.mxu0 %v122
  %540 = vmatpush.msra.mxu0 %v121
  %541 = vmatpush.msra.mxu0 %v120
  %542 = vmatpush.msra.mxu0 %v119
  %543 = vmatpush.msra.mxu0 %v118
  %544 = vmatpush.msra.mxu0 %v117
  %545 = vmatpush.msra.mxu0 %v116
  %546 = vmatpush.msra.mxu0 %v115
  %547 = vmatpush.msra.mxu0 %v114
  %548 = vmatmul.f32.gmra.mxu0 %v361
  %v549 = vpop.f32.mrf.mxu0
  %v550 = vadd.f32 %v521, %v549
  %551 = vmatmul.f32.gmra.mxu0 %v363
  %v552 = vpop.f32.mrf.mxu0
  %v553 = vadd.f32 %v524, %v552
  %554 = vmatmul.f32.gmra.mxu0 %v394
  %v555 = vpop.f32.mrf.mxu0
  %v556 = vadd.f32 %v527, %v555
  %557 = vmatmul.f32.gmra.mxu0 %v402
  %v558 = vpop.f32.mrf.mxu0
  %v559 = vadd.f32 %v530, %v558
  %560 = vdwg.mxu0
  %561 = vst.msk [vmem:[%s5] sm:$0xff] %vm174, %v550
  %562 = vst.msk [vmem:[%s5 + $0x8] sm:$0xff] %vm174, %v553
  %563 = vst.msk [vmem:[%s5 + $0x10] sm:$0xff] %vm174, %v556
  %564 = vst.msk [vmem:[%s5 + $0x18] sm:$0xff] %vm174, %v559
  // Predicated region
  $region22: #{net_forward.1} parent=0 // pred_check
    _
  $region23: #{net_forward.1} parent=0 // pred_check_branch
    %566 = sbr.rel (0) target = $region25
  $region24: #{net_forward.1} parent=0 // pred_region
    _
  $region25: #{net_forward.1} parent=0 // pred_fallthru
    _
  // Predicated region
  $region26: #{net_forward.1} parent=0 // pred_check
    _
  $region27: #{net_forward.1} parent=0 // pred_check_branch
    %568 = sbr.rel (0) target = $region29
  $region28: #{net_forward.1} parent=0 // pred_region
    _
  $region29: #{net_forward.1} parent=0 // pred_fallthru
    _

</llo_original>
